<compile_context>
chip_gen: v6e
topology: v6e:2x2x1
jax: 0.10.0
libtpu: 0.0.40
codegen_flags: <defaults>
</compile_context>

<pallas_src>
import functools

import jax
import jax.numpy as jnp
from jax.experimental import pallas as pl
from jax.experimental.pallas import tpu as pltpu


def _round_up(x, m):
    return ((x + m - 1) // m) * m


def _choose_tn(a_flat, b_flat, tn_target):
    """Pick the lane-tile width TN (multiple of 128).

    Constraints:
      * the A/B boundary must land on a tile edge (a_pad % tn == 0), so padding
        waste grows with tn -> bound waste to <= max(256 lanes, 5% of payload);
      * keep >= ~8 tiles when the payload allows, so v7x's two TensorCores get a
        balanced share of the "parallel" streaming axis;
      * otherwise take the largest candidate <= tn_target (1-4 MiB blocks
        amortize the ~0.35us per-grid-step overhead).
    """
    a128 = _round_up(max(a_flat, 1), 128)
    b128 = _round_up(max(b_flat, 1), 128)
    payload = a_flat + b_flat
    max_tiles = (a128 + b128) // 128
    min_tiles = min(8, max_tiles)
    best = 128
    cand = 256
    while cand <= tn_target:
        a_pad = _round_up(a128, cand)
        b_pad = _round_up(b128, cand)
        n_tiles = (a_pad + b_pad) // cand
        waste = (a_pad + b_pad) - payload
        if n_tiles >= min_tiles and waste <= max(256, int(0.05 * payload)):
            best = cand
        cand *= 2
    return best


def _projector_kernel(h_ref, wpost_ref, out_ref, *, hp, n_a_tiles):
    """One lane-dense output tile of the fused A/B hypernets.

    h_ref    : (2*hp, 1)   resident (constant index_map): [relu(h_A); relu(h_B)]
    wpost_ref: (hp, TN)    streamed tile of [post_A.T | post_B.T]
    out_ref  : (1, TN)     lane-dense output tile
    """
    # First n_a_tiles tiles belong to the A chain, the rest to the B chain.
    is_b = pl.program_id(0) >= n_a_tiles
    h = h_ref[...]
    h_sel = jnp.where(is_b, h[hp:, :], h[:hp, :])            # (hp, 1)

    # GEMV on the VPU: broadcast-multiply + sublane reduce (no MXU for M=1, K=hp);
    # trivially hidden under the w_post HBM stream.
    out_ref[...] = jnp.sum(h_sel * wpost_ref[...], axis=0, keepdims=True)


def prepare_projector_params(params, hidden_dim, *, tn_target=65536):
    """One-time weight prep (amortized across all forward calls).

    params: torch-layout weights (out_features, in_features), float32:
      pre_A/pre_B : (H, D+1),  post_A/post_B : (flat, H)
    Returns packed weights + tiling metadata.
    """
    pre_a = jnp.asarray(params["pre_A"], jnp.float32)
    pre_b = jnp.asarray(params["pre_B"], jnp.float32)
    post_a = jnp.asarray(params["post_A"], jnp.float32)
    post_b = jnp.asarray(params["post_B"], jnp.float32)

    h = hidden_dim
    hp = _round_up(h, 8)                      # sublane-aligned hidden dim
    d1 = pre_a.shape[1]                       # input_dim + 1
    a_flat = post_a.shape[0]
    b_flat = post_b.shape[0]

    # Lane tile: big enough to amortize per-step overhead, but cap block bytes
    # (double-buffered) and A/B padding waste; see _choose_tn.
    max_block_bytes = 4 * 1024 * 1024
    tn_cap = max(128, (max_block_bytes // (hp * 4)) // 128 * 128)
    tn = _choose_tn(a_flat, b_flat, min(tn_target, tn_cap))

    a_pad = _round_up(_round_up(a_flat, 128), tn)
    b_pad = _round_up(_round_up(b_flat, 128), tn)

    # Fused pre weight (native (out,in) layout: long D+1 axis on lanes).
    w_pre = jnp.zeros((2 * hp, d1), jnp.float32)
    w_pre = w_pre.at[:h].set(pre_a)
    w_pre = w_pre.at[hp:hp + h].set(pre_b)

    # Fused post weight, pre-transposed ONCE to (in, out), zero-padded so tiles
    # never straddle the A/B boundary (padding contributes exact zeros).
    w_post = jnp.zeros((hp, a_pad + b_pad), jnp.float32)
    w_post = w_post.at[:h, :a_flat].set(post_a.T)
    w_post = w_post.at[:h, a_pad:a_pad + b_flat].set(post_b.T)

    return {
        "w_pre": w_pre, "w_post": w_post,
        "hp": hp, "d1": d1, "tn": tn,
        "a_flat": a_flat, "b_flat": b_flat,
        "a_pad": a_pad, "b_pad": b_pad,
    }


def projector_forward(x, layer_idx, prepared, module_name, input_dim,
                      output_dim, lora_rank):
    """x: (1, input_dim) float32. Returns (lora_A, lora_B)."""
    hp = prepared["hp"]
    tn = prepared["tn"]
    a_flat, b_flat = prepared["a_flat"], prepared["b_flat"]
    a_pad, b_pad = prepared["a_pad"], prepared["b_pad"]
    w_pre, w_post = prepared["w_pre"], prepared["w_post"]

    # Glue: torch does cat([x, layer_idx.view(-1,1)], dim=1) -- tiny (1, D+1) copy.
    idx = jnp.asarray(layer_idx, jnp.float32).reshape(1, 1)
    net_in = jnp.concatenate([x.astype(jnp.float32), idx], axis=1)   # (1, D+1)

    # Hoisted pre-GEMV: h = relu(W_pre @ net^T), computed ONCE (plain XLA, tiny),
    # instead of being recomputed on every streaming grid step inside the kernel.
    h = jax.nn.relu(w_pre @ net_in[0]).reshape(2 * hp, 1)            # (2*hp, 1)

    n_tot = a_pad + b_pad
    n_tiles = n_tot // tn
    n_a_tiles = a_pad // tn

    kernel = functools.partial(_projector_kernel, hp=hp, n_a_tiles=n_a_tiles)

    cost = pl.CostEstimate(
        flops=int(2 * hp * n_tot),
        transcendentals=0,
        bytes_accessed=int(4 * (w_post.size + h.size + n_tot)),
    )

    out = pl.pallas_call(
        kernel,
        out_shape=jax.ShapeDtypeStruct((1, n_tot), jnp.float32),
        grid=(n_tiles,),
        in_specs=[
            # hidden activation: constant block index -> VMEM-resident, no re-DMA.
            pl.BlockSpec((2 * hp, 1), lambda i: (0, 0)),
            # post weight: streamed, double-buffered by the Pallas pipeline.
            pl.BlockSpec((hp, tn), lambda i: (0, i)),
        ],
        out_specs=pl.BlockSpec((1, tn), lambda i: (0, i)),
        compiler_params=pltpu.CompilerParams(
            dimension_semantics=("parallel",),          # v7x: shard tiles on 2 TCs
            vmem_limit_bytes=32 * 1024 * 1024,          # safe on v5e/v6e/v7x
        ),
        cost_estimate=cost,
    )(h, w_post)

    a_vec = out[0, :a_flat]
    b_vec = out[0, a_pad:a_pad + b_flat]

    # Glue: final reshapes, matching MLPHypernet.forward(...).reshape(in, out).
    if module_name == "down_proj":
        lora_A = a_vec.reshape(lora_rank, output_dim)
        lora_B = b_vec.reshape(input_dim, lora_rank)
    else:
        lora_A = a_vec.reshape(lora_rank, input_dim)
        lora_B = b_vec.reshape(output_dim, lora_rank)
    return lora_A, lora_B


def init_projector_params(key, module_name, input_dim, output_dim, lora_rank,
                          hidden_dim, std=1e-7):
    """Matches ProjectorLoRA.init_layer: N(0, std), nn.Linear (out, in) layout.
    (Torch uses std=1e-7; `std` is overridable for numerically meaningful tests.)"""
    k1, k2, k3, k4 = jax.random.split(key, 4)
    if module_name == "down_proj":
        post_a_out = output_dim * lora_rank
        post_b_out = input_dim * lora_rank
    else:
        post_a_out = input_dim * lora_rank
        post_b_out = output_dim * lora_rank
    return {
        "pre_A": std * jax.random.normal(k1, (hidden_dim, input_dim + 1), jnp.float32),
        "post_A": std * jax.random.normal(k2, (post_a_out, hidden_dim), jnp.float32),
        "pre_B": std * jax.random.normal(k3, (hidden_dim, input_dim + 1), jnp.float32),
        "post_B": std * jax.random.normal(k4, (post_b_out, hidden_dim), jnp.float32),
    }


def _reference_forward(x, layer_idx, params, module_name, input_dim,
                       output_dim, lora_rank):
    """Pure-JAX reference mirroring the torch module exactly."""
    idx = jnp.full((1, 1), float(layer_idx), dtype=jnp.float32)
    net_in = jnp.concatenate([x, idx], axis=1)
    h_a = jax.nn.relu(net_in @ params["pre_A"].T)
    a_flat = h_a @ params["post_A"].T
    h_b = jax.nn.relu(net_in @ params["pre_B"].T)
    b_flat = h_b @ params["post_B"].T
    if module_name == "down_proj":
        return (a_flat.reshape(lora_rank, output_dim),
                b_flat.reshape(input_dim, lora_rank))
    return (a_flat.reshape(lora_rank, input_dim),
            b_flat.reshape(output_dim, lora_rank))


def _run_case(key, module_name, layer_idx, input_dim, output_dim, lora_rank,
              hidden_dim):
    kx, kp = jax.random.split(key)
    x = jax.random.normal(kx, (1, input_dim), jnp.float32)
    # Larger std than torch's 1e-7 so the allclose check is numerically meaningful;
    # the forward math is identical.
    params = init_projector_params(kp, module_name, input_dim, output_dim,
                                   lora_rank, hidden_dim, std=0.05)

    # One-time weight prep (transpose/concat/pad amortized across all calls).
    prepared = prepare_projector_params(params, hidden_dim)

    lora_A, lora_B = projector_forward(x, layer_idx, prepared, module_name,
                                       input_dim, output_dim, lora_rank)
    jax.block_until_ready((lora_A, lora_B))

    ref_A, ref_B = _reference_forward(x, layer_idx, params, module_name,
                                      input_dim, output_dim, lora_rank)
    assert lora_A.shape == ref_A.shape, (lora_A.shape, ref_A.shape)
    assert lora_B.shape == ref_B.shape, (lora_B.shape, ref_B.shape)
    assert jnp.allclose(lora_A, ref_A, atol=1e-6, rtol=1e-5)
    assert jnp.allclose(lora_B, ref_B, atol=1e-6, rtol=1e-5)


if __name__ == "__main__":
    key = jax.random.PRNGKey(0)
    k1, k2 = jax.random.split(key)

    # Small shapes consistent with the module's forward.
    # Case 1: up_proj (single A tile + single B tile path).
    _run_case(k1, module_name="up_proj", layer_idx=3,
              input_dim=16, output_dim=32, lora_rank=4, hidden_dim=8)

    # Case 2: down_proj with unequal A/B halves (multi-tile streaming path,
    # exercises the per-tile A/B select and the waste-aware TN choice).
    _run_case(k2, module_name="down_proj", layer_idx=11,
              input_dim=64, output_dim=256, lora_rank=8, hidden_dim=8)

    print("KERNEL_OK")
</pallas_src>

<mosaic_0001>
module attributes {stable_mosaic.version = 11 : i64} {
  func.func @_projector_kernel(%arg0: i32, %arg1: memref<16x1xf32, #tpu.memory_space<vmem>>, %arg2: memref<8x128xf32, #tpu.memory_space<vmem>>, %arg3: memref<1x128xf32, #tpu.memory_space<vmem>>) attributes {dimension_semantics = [#tpu.dimension_semantics<parallel>], iteration_bounds = array<i64: 2>, scalar_prefetch = 0 : i64, scratch_operands = 0 : i64, tpu.core_type = #tpu.core_type<tc>, window_params = [{pipeline_mode = #tpu.pipeline_mode<synchronous>, transform_indices = @transform_0, window_bounds = array<i64: 16, 1>}, {transform_indices = @transform_1, window_bounds = array<i64: 8, 128>}, {transform_indices = @transform_2, window_bounds = array<i64: 1, 128>}]} {
    %c1_i32 = arith.constant 1 : i32
    %0 = arith.cmpi sge, %arg0, %c1_i32 : i32
    %c0 = arith.constant 0 : index
    %c0_0 = arith.constant 0 : index
    %1 = vector.load %arg1[%c0, %c0_0] : memref<16x1xf32, #tpu.memory_space<vmem>>, vector<16x1xf32>
    %2 = vector.extract_strided_slice %1 {offsets = [8, 0], sizes = [8, 1], strides = [1, 1]} : vector<16x1xf32> to vector<8x1xf32>
    %3 = vector.extract_strided_slice %1 {offsets = [0, 0], sizes = [8, 1], strides = [1, 1]} : vector<16x1xf32> to vector<8x1xf32>
    %4 = arith.select %0, %2, %3 : vector<8x1xf32>
    %c0_1 = arith.constant 0 : index
    %c0_2 = arith.constant 0 : index
    %5 = vector.load %arg2[%c0_1, %c0_2] : memref<8x128xf32, #tpu.memory_space<vmem>>, vector<8x128xf32>
    %6 = vector.broadcast %4 : vector<8x1xf32> to vector<8x128xf32>
    %7 = arith.mulf %6, %5 : vector<8x128xf32>
    %cst = arith.constant dense<0.000000e+00> : vector<128xf32>
    %8 = vector.multi_reduction <add>, %7, %cst [0] : vector<8x128xf32> to vector<128xf32>
    %9 = vector.shape_cast %8 : vector<128xf32> to vector<1x128xf32>
    %c0_3 = arith.constant 0 : index
    %c0_4 = arith.constant 0 : index
    %10 = vector.load %arg3[%c0_3, %c0_4] : memref<1x128xf32, #tpu.memory_space<vmem>>, vector<1x128xf32>
    tpu.vector_store %arg3[%c0_3, %c0_4], %9 {strides = array<i32>} : memref<1x128xf32, #tpu.memory_space<vmem>>, vector<1x128xf32>,
    return
  }
  func.func @transform_0(%arg0: i32) -> (i32, i32) {
    %c0_i32 = arith.constant 0 : i32
    %c0_i32_0 = arith.constant 0 : i32
    %c0_i32_1 = arith.constant 0 : i32
    return %c0_i32, %c0_i32_0 : i32, i32
  }
  func.func @transform_1(%arg0: i32) -> (i32, i32) {
    %c0_i32 = arith.constant 0 : i32
    %c0_i32_0 = arith.constant 0 : i32
    return %c0_i32, %arg0 : i32, i32
  }
  func.func @transform_2(%arg0: i32) -> (i32, i32) {
    %c0_i32 = arith.constant 0 : i32
    %c0_i32_0 = arith.constant 0 : i32
    return %c0_i32, %arg0 : i32, i32
  }
}

</mosaic_0001>

<llo_original>
// kernel: tpu_custom_call.1
$region0: #{tpu_custom_call.1}
  #allocation0 [shape = 'u32[]', space=smem, size = 0x4, offset = 0x4, fixed_abs, tag = 'smem constant byte address 0x4 - core index']
  #allocation1 [shape = 'u32[144,128]{1,0:T(1,128)}', space=vmem, size = 0x12000, scoped, tag = 'internal scratch']
  %s0 = inlined_call_operand.vmem [shape: f32[16,1], index: 0, kind: input, shape index: {}]
  %s1 = inlined_call_operand.vmem [shape: f32[8,256], index: 1, kind: input, shape index: {}]
  %s2 = inlined_call_operand.hbm [shape: f32[1,256], index: 2, kind: output, shape index: {}]
  %s3 = sld [smem:[#allocation0]]
  $region41: #{tpu_custom_call.1} parent=0
    _
  %s5 = ssub.s32 1, %s3
  %s6 = scalar_select 0, %s5, %s3
  $region1: #{tpu_custom_call.1} parent=0
    #allocation2 [shape = 'u8[1024]{0}', space=vmem, size = 0x400, scoped, tag = 'output window, operand 0']
    #allocation3 [shape = 's32[2]{0}', space=sflag, size = 0x8, scoped, tag = 'scoped memory for tpu_custom_call.1']
    %7 = vsyncpa [#allocation3], 0
    %s8 = scalar_lea.sflag [#allocation3], 1
    %9 = vsyncpa %s8, 0
    loop: start=0, step=1, limit=4
    $region2: #{tpu_custom_call.1} parent=1 // loop_pre_header
      _
    $region3: #{tpu_custom_call.1} parent=1 // loop_header
      %s11 = sphi 0, %s15
      %p12 = scmp.ge.s32.totalorder %s11, 4
      %s19 = sphi 0, %s19
      %s21 = sphi 0, %s19
      %s22 = sphi 0, %s21
      %s36 = sphi 0, %s22
      %s42 = sphi 0, %s44
      %s45 = sphi 0, %s42
      %s46 = sphi 0, %s45
      %s62 = sphi 0, %s46
      %s68 = sphi 0, %s70
      %s71 = sphi 0, %s68
      %s72 = sphi 0, %s71
      %s88 = sphi 0, %s72
    $region4: #{tpu_custom_call.1} parent=1 // loop_header_branch
      %14 = sbr.rel (%p12) target = $region8
    $region5: #{tpu_custom_call.1} parent=1 // loop_body
      %s16 = ssub.s32 %s11, 1
      %s17 = ssub.s32 %s11, 2
      %s18 = sadd.s32 %s11, 1
      %s20 = sadd.s32 %s19, 1
      %p23 = scmp.eq.s32.totalorder %s11, 1
      %p24 = scmp.ne.s32.totalorder %s19, %s21
      %p25 = scmp.eq.s32.totalorder %s11, 0
      %p26 = por %p24, %p25
      %p27 = scmp.ne.s32.totalorder %s19, %s21
      %p28 = scmp.eq.s32.totalorder %s16, 1
      %p29 = por %p27, %p28
      %p30 = scmp.ne.s32.totalorder %s21, %s22
      %p31 = scmp.eq.s32.totalorder %s16, 0
      %p32 = por %p30, %p31
      %p33 = scmp.ne.s32.totalorder %s21, %s22
      %p34 = scmp.eq.s32.totalorder %s17, 1
      %p35 = por %p33, %p34
      %p37 = scmp.ne.s32.totalorder %s22, %s36
      %p38 = scmp.eq.s32.totalorder %s17, 0
      %p39 = por %p37, %p38
      %s40 = ssub.s32 %s11, %s18
      %p41 = scmp.eq.s32.totalorder %s40, 0
      %s43 = sadd.s32 %s42, 1
      %s44 = scalar_select %p41, %s42, %s43
      %p47 = pneg %p41
      %p48 = scmp.eq.s32.totalorder %s11, 1
      %p49 = por %p47, %p48
      %p50 = scmp.ne.s32.totalorder %s42, %s45
      %p51 = scmp.eq.s32.totalorder %s11, 0
      %p52 = por %p50, %p51
      %p53 = scmp.ne.s32.totalorder %s42, %s45
      %p54 = scmp.eq.s32.totalorder %s16, 1
      %p55 = por %p53, %p54
      %p56 = scmp.ne.s32.totalorder %s45, %s46
      %p57 = scmp.eq.s32.totalorder %s16, 0
      %p58 = por %p56, %p57
      %p59 = scmp.ne.s32.totalorder %s45, %s46
      %p60 = scmp.eq.s32.totalorder %s17, 1
      %p61 = por %p59, %p60
      %p63 = scmp.ne.s32.totalorder %s46, %s62
      %p64 = scmp.eq.s32.totalorder %s17, 0
      %p65 = por %p63, %p64
      %s66 = ssub.s32 %s11, %s18
      %p67 = scmp.eq.s32.totalorder %s66, 0
      %s69 = sadd.s32 %s68, 1
      %s70 = scalar_select %p67, %s68, %s69
      %p73 = pneg %p67
      %p74 = scmp.eq.s32.totalorder %s11, 1
      %p75 = por %p73, %p74
      %p76 = scmp.ne.s32.totalorder %s68, %s71
      %p77 = scmp.eq.s32.totalorder %s11, 0
      %p78 = por %p76, %p77
      %p79 = scmp.ne.s32.totalorder %s68, %s71
      %p80 = scmp.eq.s32.totalorder %s16, 1
      %p81 = por %p79, %p80
      %p82 = scmp.ne.s32.totalorder %s71, %s72
      %p83 = scmp.eq.s32.totalorder %s16, 0
      %p84 = por %p82, %p83
      %p85 = scmp.ne.s32.totalorder %s71, %s72
      %p86 = scmp.eq.s32.totalorder %s17, 1
      %p87 = por %p85, %p86
      %p89 = scmp.ne.s32.totalorder %s72, %s88
      %p90 = scmp.eq.s32.totalorder %s17, 0
      %p91 = por %p89, %p90
      %p92 = scmp.le.s32.totalorder 1, %s11
      %p93 = scmp.lt.s32.totalorder %s11, 3
      %p94 = pnand %p92, %p93
      %p95 = pneg %p94
      // Predicated region
      $region9: #{tpu_custom_call.1} parent=5 // pred_check
        _
      $region10: #{tpu_custom_call.1} parent=5 // pred_check_branch
        %97 = sbr.rel (%p94) target = $region12
      $region11: #{tpu_custom_call.1} parent=5 // pred_region
        %s98 = ssub.s32 %s11, 1
        // Predicated region
        $region13: #{tpu_custom_call.1} parent=11 // pred_check
          %p99 = pneg %p32
        $region14: #{tpu_custom_call.1} parent=11 // pred_check_branch
          %101 = sbr.rel (%p99) target = $region16
        $region15: #{tpu_custom_call.1} parent=11 // pred_region
          _
        $region16: #{tpu_custom_call.1} parent=11 // pred_fallthru
          _
      $region12: #{tpu_custom_call.1} parent=5 // pred_fallthru
        _
      %p102 = scmp.lt.s32.totalorder %s11, 2
      // Predicated region
      $region17: #{tpu_custom_call.1} parent=5 // pred_check
        %p103 = pneg %p102
      $region18: #{tpu_custom_call.1} parent=5 // pred_check_branch
        %105 = sbr.rel (%p103) target = $region20
      $region19: #{tpu_custom_call.1} parent=5 // pred_region
        // Predicated region
        $region21: #{tpu_custom_call.1} parent=19 // pred_check
          %p106 = pneg %p52
        $region22: #{tpu_custom_call.1} parent=19 // pred_check_branch
          %108 = sbr.rel (%p106) target = $region24
        $region23: #{tpu_custom_call.1} parent=19 // pred_region
          %p109 = scmp.lt.s32.totalorder %s11, 1
          %s110 = scalar_select %p109, %s11, 1
          %s111 = smul.addr %s110, 8
          %s112 = scalar_lea.vmem %s1, %s111
        $region24: #{tpu_custom_call.1} parent=19 // pred_fallthru
          _
      $region20: #{tpu_custom_call.1} parent=5 // pred_fallthru
        _
      %p113 = scmp.le.s32.totalorder 1, %s11
      %p114 = scmp.lt.s32.totalorder %s11, 3
      %p115 = pnand %p113, %p114
      %p116 = pneg %p115
      // Predicated region
      $region25: #{tpu_custom_call.1} parent=5 // pred_check
        _
      $region26: #{tpu_custom_call.1} parent=5 // pred_check_branch
        %118 = sbr.rel (%p115) target = $region28
      $region27: #{tpu_custom_call.1} parent=5 // pred_region
        %s119 = ssub.s32 %s11, 1
        %p120 = pneg %p32
        %p121 = pneg %p29
        %p122 = scmp.lt.s32.totalorder %s16, 1
        %s123 = scalar_select %p122, %s16, 1
        %s124 = smul.addr %s123, 8
        %s125 = scalar_lea.vmem %s1, %s124
        %p126 = pneg %p58
        %p127 = pneg %p55
        %p128 = pneg %p84
        %p129 = pneg %p81
        %s130 = sand.u32 %s71, 1
        %s131 = scalar_lea.sflag [#allocation3], %s130
        %s132 = sand.u32 %s71, 1
        %s133 = scalar_lea.vmem [#allocation2], %s132
        %p134 = scmp.lt.s32.totalorder %s16, 1
        %s135 = scalar_select %p134, %s16, 1
        %s136 = smul.addr %s135, 8
        %s137 = scalar_lea.vmem %s1, %s136
        %p138 = scmp.ge.s32.totalorder %s16, 1
        %v139 = vld [vmem:[%s0] sm:$0xff]
        %v140 = vld [vmem:[%s0 + $0x8] sm:$0xff]
        %s141 = scalar_select %p138, 1, 0
        %v142 = vstv %s141
        %vm143 = vcmp.eq.s32.totalorder %v142, 1
        %v144 = vsel %vm143, %v140, %v139
        %v145 = vld [vmem:[%s137] sm:$0xff]
        %147 = vset.pattern.permute.xlu0 0
        %148 = vperm.xlu0 %147, %v144
        %v149 = vpop.permute.xlu0 %148
        %v151 = vmul.f32 %v149, %v145
        %v152 = vrot.slane %v151, 4
        %v153 = vadd.f32 %v151, %v152
        %v154 = vrot.slane %v153, 2
        %v155 = vadd.f32 %v153, %v154
        %v156 = vrot.slane %v155, 1
        %v157 = vadd.f32 %v155, %v156
        %158 = vst [vmem:[%s133] sm:$0x1] %v157
        %s159 = sand.u32 %s71, 1
        %s160 = scalar_lea.sflag [#allocation3], %s159
        %s161 = sand.u32 %s71, 1
        %s162 = scalar_lea.vmem [#allocation2], %s161
        // Predicated region
        $region29: #{tpu_custom_call.1} parent=27 // pred_check
          %p163 = pneg %p81
        $region30: #{tpu_custom_call.1} parent=27 // pred_check_branch
          %165 = sbr.rel (%p163) target = $region32
        $region31: #{tpu_custom_call.1} parent=27 // pred_region
          %s167 = ssub.s32 16, 16
          %168 = vsyncadd %s160, %s167
          %s169 = smul.addr %s16, 16
          %s170 = scalar_lea.hbm %s2, %s169
          %s172 = sshll.u32 %s162, 4
          %s173 = int_to_ptr.vmem [resolvable:$true] %s172
          %175 = dma.vmem_to_hbm [thread:$0]  %s173, 16, %s170, %s160
        $region32: #{tpu_custom_call.1} parent=27 // pred_fallthru
          _
      $region28: #{tpu_custom_call.1} parent=5 // pred_fallthru
        _
      %p176 = scmp.le.s32.totalorder 2, %s11
      // Predicated region
      $region33: #{tpu_custom_call.1} parent=5 // pred_check
        %p177 = pneg %p176
      $region34: #{tpu_custom_call.1} parent=5 // pred_check_branch
        %179 = sbr.rel (%p177) target = $region36
      $region35: #{tpu_custom_call.1} parent=5 // pred_region
        %s180 = ssub.s32 %s11, 2
        // Predicated region
        $region37: #{tpu_custom_call.1} parent=35 // pred_check
          %p181 = pneg %p87
        $region38: #{tpu_custom_call.1} parent=35 // pred_check_branch
          %183 = sbr.rel (%p181) target = $region40
        $region39: #{tpu_custom_call.1} parent=35 // pred_region
          %s184 = sand.u32 %s72, 1
          %s185 = scalar_lea.sflag [#allocation3], %s184
          %s186 = sand.u32 %s72, 1
          %s187 = scalar_lea.vmem [#allocation2], %s186
          %188 = dma.done %s185, 16
        $region40: #{tpu_custom_call.1} parent=35 // pred_fallthru
          _
      $region36: #{tpu_custom_call.1} parent=5 // pred_fallthru
        _
    $region6: #{tpu_custom_call.1} parent=1 // loop_footer
      %s15 = sadd.s32 1, %s11
    $region7: #{tpu_custom_call.1} parent=1 // loop_footer_branch
      %10 = sbr.rel target = $region3
    $region8: #{tpu_custom_call.1} parent=1 // loop_exit
      _
    %189 = vsyncpa [#allocation3], 1
    %s190 = scalar_lea.sflag [#allocation3], 1
    %191 = vsyncpa %s190, 1

</llo_original>
